<compile_context>
chip_gen: v7x
topology: tpu7x:2x2x1
jax: 0.10.0
libtpu: 0.0.40
codegen_flags: <defaults>
</compile_context>

<pallas_src>
import numpy as np
import jax
import jax.numpy as jnp
from jax.experimental import pallas as pl
from jax.experimental.pallas import tpu as pltpu

N_SAMPLES = 256          # number of points being clustered


def _ari_kernel(t_row_ref, t_col_ref, p_row_ref, p_col_ref, out_ref):
    # t_row/p_row: (1, N) int32 labels, samples on the lane axis
    # t_col/p_col: (N, 1) int32 labels, samples on the sublane axis
    t_row = t_row_ref[...]                                       # (1, N)
    t_col = t_col_ref[...]                                       # (N, 1)
    p_row = p_row_ref[...]                                       # (1, N)
    p_col = p_col_ref[...]                                       # (N, 1)

    # Pairwise co-membership matrices (outer equality, two-sided broadcast).
    same_t = (t_col == t_row).astype(jnp.float32)                # (N, N)
    same_p = (p_col == p_row).astype(jnp.float32)                # (N, N)

    n = jnp.float32(float(N_SAMPLES))

    # Integer-valued sums <= N^2 = 65536 -> exact in f32.
    sum_sq = jnp.sum(same_t * same_p)       # = sum_ij C_ij^2
    sum_a2 = jnp.sum(same_t)                # = sum_i a_i^2  (true class sizes)
    sum_b2 = jnp.sum(same_p)                # = sum_j b_j^2  (pred class sizes)

    # comb(x, 2) sums
    sum_comb = 0.5 * (sum_sq - n)
    sum_comb_a = 0.5 * (sum_a2 - n)
    sum_comb_b = 0.5 * (sum_b2 - n)
    comb_n = 0.5 * n * (n - 1.0)

    expected = sum_comb_a * sum_comb_b / comb_n
    max_index = 0.5 * (sum_comb_a + sum_comb_b)
    numer = sum_comb - expected
    denom = max_index - expected

    # sklearn convention: perfect / degenerate agreement -> 1.0
    # (relative tolerance: f32 rounding can make a mathematically-zero denom tiny-nonzero)
    tol = jnp.float32(1e-6) * jnp.maximum(jnp.abs(max_index), jnp.float32(1.0))
    ari = jnp.where(jnp.abs(denom) <= tol, jnp.float32(1.0), numer / denom)
    out_ref[0, 0] = ari


def adjusted_rand_index(true_labels: jax.Array, pred_labels: jax.Array) -> jax.Array:
    """true_labels / pred_labels: integer arrays of shape (N_SAMPLES,), any values."""
    t = true_labels.astype(jnp.int32)
    p = pred_labels.astype(jnp.int32)
    # Free reshapes (no transpose): give the kernel both orientations of each
    # label vector so the (N, N) outer comparisons need no in-kernel relayout.
    t_row = t.reshape(1, N_SAMPLES)
    t_col = t.reshape(N_SAMPLES, 1)
    p_row = p.reshape(1, N_SAMPLES)
    p_col = p.reshape(N_SAMPLES, 1)
    out = pl.pallas_call(
        _ari_kernel,
        out_shape=jax.ShapeDtypeStruct((1, 1), jnp.float32),
        in_specs=[
            pl.BlockSpec(memory_space=pltpu.MemorySpace.VMEM),
            pl.BlockSpec(memory_space=pltpu.MemorySpace.VMEM),
            pl.BlockSpec(memory_space=pltpu.MemorySpace.VMEM),
            pl.BlockSpec(memory_space=pltpu.MemorySpace.VMEM),
        ],
        out_specs=pl.BlockSpec(memory_space=pltpu.MemorySpace.SMEM),
    )(t_row, t_col, p_row, p_col)
    return out[0, 0]


def _ari_reference(true_labels: np.ndarray, pred_labels: np.ndarray) -> float:
    """Pure-numpy adjusted_rand_score (pair-counting form) for the correctness check."""
    t = np.asarray(true_labels).reshape(-1)
    p = np.asarray(pred_labels).reshape(-1)
    n = float(t.size)
    same_t = (t[:, None] == t[None, :]).astype(np.float64)
    same_p = (p[:, None] == p[None, :]).astype(np.float64)
    sum_comb = 0.5 * ((same_t * same_p).sum() - n)
    sum_comb_a = 0.5 * (same_t.sum() - n)
    sum_comb_b = 0.5 * (same_p.sum() - n)
    comb_n = 0.5 * n * (n - 1.0)
    expected = sum_comb_a * sum_comb_b / comb_n
    max_index = 0.5 * (sum_comb_a + sum_comb_b)
    denom = max_index - expected
    if denom == 0.0:
        return 1.0
    return float((sum_comb - expected) / denom)


if __name__ == "__main__":
    key = jax.random.PRNGKey(0)
    k1, k2 = jax.random.split(key)
    # Two synthetic clusterings over N_SAMPLES points (5 true clusters, 4 predicted).
    true_q = jax.random.randint(k1, (N_SAMPLES,), 0, 5, dtype=jnp.int32)
    pred_q = jax.random.randint(k2, (N_SAMPLES,), 0, 4, dtype=jnp.int32)

    ari = adjusted_rand_index(true_q, pred_q)
    ari = jax.block_until_ready(ari)

    ref = _ari_reference(np.asarray(true_q), np.asarray(pred_q))
    assert abs(float(ari) - ref) < 1e-5, (float(ari), ref)

    # Label values are arbitrary (sklearn semantics): shifting ids must not change ARI.
    ari_shift = jax.block_until_ready(adjusted_rand_index(true_q + 100, pred_q + 7))
    assert abs(float(ari_shift) - ref) < 1e-5, (float(ari_shift), ref)

    print("KERNEL_OK")
</pallas_src>

<mosaic_0001>
module attributes {stable_mosaic.version = 11 : i64} {
  func.func @_ari_kernel(%arg0: memref<1x256xi32, #tpu.memory_space<vmem>>, %arg1: memref<256x1xi32, #tpu.memory_space<vmem>>, %arg2: memref<1x256xi32, #tpu.memory_space<vmem>>, %arg3: memref<256x1xi32, #tpu.memory_space<vmem>>, %arg4: memref<1x1xf32, #tpu.memory_space<smem>>) attributes {dimension_semantics = [], scalar_prefetch = 0 : i64, scratch_operands = 0 : i64, tpu.core_type = #tpu.core_type<tc>} {
    %c0 = arith.constant 0 : index
    %c0_0 = arith.constant 0 : index
    %0 = vector.load %arg0[%c0, %c0_0] : memref<1x256xi32, #tpu.memory_space<vmem>>, vector<1x256xi32>
    %c0_1 = arith.constant 0 : index
    %c0_2 = arith.constant 0 : index
    %1 = vector.load %arg1[%c0_1, %c0_2] : memref<256x1xi32, #tpu.memory_space<vmem>>, vector<256x1xi32>
    %c0_3 = arith.constant 0 : index
    %c0_4 = arith.constant 0 : index
    %2 = vector.load %arg2[%c0_3, %c0_4] : memref<1x256xi32, #tpu.memory_space<vmem>>, vector<1x256xi32>
    %c0_5 = arith.constant 0 : index
    %c0_6 = arith.constant 0 : index
    %3 = vector.load %arg3[%c0_5, %c0_6] : memref<256x1xi32, #tpu.memory_space<vmem>>, vector<256x1xi32>
    %4 = vector.broadcast %1 : vector<256x1xi32> to vector<256x256xi32>
    %5 = vector.broadcast %0 : vector<1x256xi32> to vector<256x256xi32>
    %6 = arith.cmpi eq, %4, %5 : vector<256x256xi32>
    %7 = arith.extui %6 : vector<256x256xi1> to vector<256x256xi32>
    %8 = arith.sitofp %7 : vector<256x256xi32> to vector<256x256xf32>
    %9 = vector.broadcast %3 : vector<256x1xi32> to vector<256x256xi32>
    %10 = vector.broadcast %2 : vector<1x256xi32> to vector<256x256xi32>
    %11 = arith.cmpi eq, %9, %10 : vector<256x256xi32>
    %12 = arith.extui %11 : vector<256x256xi1> to vector<256x256xi32>
    %13 = arith.sitofp %12 : vector<256x256xi32> to vector<256x256xf32>
    %14 = arith.mulf %8, %13 : vector<256x256xf32>
    %15 = vector.shape_cast %14 : vector<256x256xf32> to vector<1x256x256xf32>
    %cst = arith.constant dense<0.000000e+00> : vector<1xf32>
    %16 = vector.multi_reduction <add>, %15, %cst [1, 2] : vector<1x256x256xf32> to vector<1xf32>
    %17 = vector.shape_cast %16 : vector<1xf32> to vector<1x1x1xf32>
    %18 = vector.extract %17[0, 0, 0] : f32 from vector<1x1x1xf32>
    %19 = vector.shape_cast %8 : vector<256x256xf32> to vector<1x256x256xf32>
    %cst_7 = arith.constant dense<0.000000e+00> : vector<1xf32>
    %20 = vector.multi_reduction <add>, %19, %cst_7 [1, 2] : vector<1x256x256xf32> to vector<1xf32>
    %21 = vector.shape_cast %20 : vector<1xf32> to vector<1x1x1xf32>
    %22 = vector.extract %21[0, 0, 0] : f32 from vector<1x1x1xf32>
    %23 = vector.shape_cast %13 : vector<256x256xf32> to vector<1x256x256xf32>
    %cst_8 = arith.constant dense<0.000000e+00> : vector<1xf32>
    %24 = vector.multi_reduction <add>, %23, %cst_8 [1, 2] : vector<1x256x256xf32> to vector<1xf32>
    %25 = vector.shape_cast %24 : vector<1xf32> to vector<1x1x1xf32>
    %26 = vector.extract %25[0, 0, 0] : f32 from vector<1x1x1xf32>
    %cst_9 = arith.constant 2.560000e+02 : f32
    %27 = arith.subf %18, %cst_9 : f32
    %cst_10 = arith.constant 5.000000e-01 : f32
    %28 = arith.mulf %cst_10, %27 : f32
    %cst_11 = arith.constant 2.560000e+02 : f32
    %29 = arith.subf %22, %cst_11 : f32
    %cst_12 = arith.constant 5.000000e-01 : f32
    %30 = arith.mulf %cst_12, %29 : f32
    %cst_13 = arith.constant 2.560000e+02 : f32
    %31 = arith.subf %26, %cst_13 : f32
    %cst_14 = arith.constant 5.000000e-01 : f32
    %32 = arith.mulf %cst_14, %31 : f32
    %cst_15 = arith.constant 5.000000e-01 : f32
    %cst_16 = arith.constant 2.560000e+02 : f32
    %33 = arith.mulf %cst_15, %cst_16 : f32
    %cst_17 = arith.constant 2.560000e+02 : f32
    %cst_18 = arith.constant 1.000000e+00 : f32
    %34 = arith.subf %cst_17, %cst_18 : f32
    %35 = arith.mulf %33, %34 : f32
    %36 = arith.mulf %30, %32 : f32
    %37 = arith.divf %36, %35 : f32
    %38 = arith.addf %30, %32 : f32
    %cst_19 = arith.constant 5.000000e-01 : f32
    %39 = arith.mulf %cst_19, %38 : f32
    %40 = arith.subf %28, %37 : f32
    %41 = arith.subf %39, %37 : f32
    %42 = math.absf %39 : f32
    %cst_20 = arith.constant 1.000000e+00 : f32
    %43 = arith.maximumf %42, %cst_20 : f32
    %cst_21 = arith.constant 9.99999997E-7 : f32
    %44 = arith.mulf %cst_21, %43 : f32
    %45 = math.absf %41 : f32
    %46 = arith.cmpf ole, %45, %44 : f32
    %47 = arith.divf %40, %41 : f32
    %cst_22 = arith.constant 1.000000e+00 : f32
    %48 = arith.select %46, %cst_22, %47 : f32
    %c0_23 = arith.constant 0 : index
    %c0_24 = arith.constant 0 : index
    %49 = memref.load %arg4[%c0_23, %c0_24] : memref<1x1xf32, #tpu.memory_space<smem>>
    memref.store %48, %arg4[%c0_23, %c0_24] : memref<1x1xf32, #tpu.memory_space<smem>>
    return
  }
}

</mosaic_0001>

<llo_original>
// kernel: tpu_custom_call.1
$region0: #{tpu_custom_call.1}
  #allocation0 [shape = 'u32[]', space=smem, size = 0x4, offset = 0x4, fixed_abs, tag = 'smem constant byte address 0x4 - core index']
  #allocation1 [shape = 'u32[144,128]{1,0:T(1,128)}', space=vmem, size = 0x12000, scoped, tag = 'internal scratch']
  %s0 = inlined_call_operand.vmem [shape: s32[1,256], index: 0, kind: input, shape index: {}]
  %s1 = inlined_call_operand.vmem [shape: s32[256,1], index: 1, kind: input, shape index: {}]
  %s2 = inlined_call_operand.vmem [shape: s32[1,256], index: 2, kind: input, shape index: {}]
  %s3 = inlined_call_operand.vmem [shape: s32[256,1], index: 3, kind: input, shape index: {}]
  %s4 = inlined_call_operand.hbm [shape: f32[1,1], index: 4, kind: output, shape index: {}]
  %s5 = sld [smem:[#allocation0]]
  $region26: #{tpu_custom_call.1} parent=0
    _
  %s7 = ssub.s32 1, %s5
  %s8 = scalar_select 0, %s7, %s5
  $region1: #{tpu_custom_call.1} parent=0
    #allocation2 [shape = 'u8[512]{0}', space=smem, size = 0x200, scoped, tag = 'output window, operand 0, single buffered']
    #allocation3 [shape = 's32[1]{0}', space=sflag, size = 0x4, scoped, tag = 'scoped memory for tpu_custom_call.1']
    %9 = vsyncpa [#allocation3], 0
    // Predicated region
    $region2: #{tpu_custom_call.1} parent=1 // pred_check
      _
    $region3: #{tpu_custom_call.1} parent=1 // pred_check_branch
      %11 = sbr.rel (0) target = $region5
    $region4: #{tpu_custom_call.1} parent=1 // pred_region
      _
    $region5: #{tpu_custom_call.1} parent=1 // pred_fallthru
      _
    // Predicated region
    $region6: #{tpu_custom_call.1} parent=1 // pred_check
      _
    $region7: #{tpu_custom_call.1} parent=1 // pred_check_branch
      %13 = sbr.rel (0) target = $region9
    $region8: #{tpu_custom_call.1} parent=1 // pred_region
      _
    $region9: #{tpu_custom_call.1} parent=1 // pred_fallthru
      _
    // Predicated region
    $region10: #{tpu_custom_call.1} parent=1 // pred_check
      _
    $region11: #{tpu_custom_call.1} parent=1 // pred_check_branch
      %15 = sbr.rel (0) target = $region13
    $region12: #{tpu_custom_call.1} parent=1 // pred_region
      _
    $region13: #{tpu_custom_call.1} parent=1 // pred_fallthru
      _
    // Predicated region
    $region14: #{tpu_custom_call.1} parent=1 // pred_check
      _
    $region15: #{tpu_custom_call.1} parent=1 // pred_check_branch
      %17 = sbr.rel (0) target = $region17
    $region16: #{tpu_custom_call.1} parent=1 // pred_region
      _
    $region17: #{tpu_custom_call.1} parent=1 // pred_fallthru
      _
    %v18 = vld [vmem:[%s0] sm:$0x3]
    %v19 = vld [vmem:[%s1] sm:$0xff]
    %v20 = vld [vmem:[%s1 + $0x8] sm:$0xff]
    %v21 = vld [vmem:[%s1 + $0x10] sm:$0xff]
    %v22 = vld [vmem:[%s1 + $0x18] sm:$0xff]
    %v23 = vld [vmem:[%s1 + $0x20] sm:$0xff]
    %v24 = vld [vmem:[%s1 + $0x28] sm:$0xff]
    %v25 = vld [vmem:[%s1 + $0x30] sm:$0xff]
    %v26 = vld [vmem:[%s1 + $0x38] sm:$0xff]
    %v27 = vld [vmem:[%s1 + $0x40] sm:$0xff]
    %v28 = vld [vmem:[%s1 + $0x48] sm:$0xff]
    %v29 = vld [vmem:[%s1 + $0x50] sm:$0xff]
    %v30 = vld [vmem:[%s1 + $0x58] sm:$0xff]
    %v31 = vld [vmem:[%s1 + $0x60] sm:$0xff]
    %v32 = vld [vmem:[%s1 + $0x68] sm:$0xff]
    %v33 = vld [vmem:[%s1 + $0x70] sm:$0xff]
    %v34 = vld [vmem:[%s1 + $0x78] sm:$0xff]
    %v35 = vld [vmem:[%s1 + $0x80] sm:$0xff]
    %v36 = vld [vmem:[%s1 + $0x88] sm:$0xff]
    %v37 = vld [vmem:[%s1 + $0x90] sm:$0xff]
    %v38 = vld [vmem:[%s1 + $0x98] sm:$0xff]
    %v39 = vld [vmem:[%s1 + $0xa0] sm:$0xff]
    %v40 = vld [vmem:[%s1 + $0xa8] sm:$0xff]
    %v41 = vld [vmem:[%s1 + $0xb0] sm:$0xff]
    %v42 = vld [vmem:[%s1 + $0xb8] sm:$0xff]
    %v43 = vld [vmem:[%s1 + $0xc0] sm:$0xff]
    %v44 = vld [vmem:[%s1 + $0xc8] sm:$0xff]
    %v45 = vld [vmem:[%s1 + $0xd0] sm:$0xff]
    %v46 = vld [vmem:[%s1 + $0xd8] sm:$0xff]
    %v47 = vld [vmem:[%s1 + $0xe0] sm:$0xff]
    %v48 = vld [vmem:[%s1 + $0xe8] sm:$0xff]
    %v49 = vld [vmem:[%s1 + $0xf0] sm:$0xff]
    %v50 = vld [vmem:[%s1 + $0xf8] sm:$0xff]
    %v51 = vld [vmem:[%s2] sm:$0x3]
    %v52 = vld [vmem:[%s3] sm:$0xff]
    %v53 = vld [vmem:[%s3 + $0x8] sm:$0xff]
    %v54 = vld [vmem:[%s3 + $0x10] sm:$0xff]
    %v55 = vld [vmem:[%s3 + $0x18] sm:$0xff]
    %v56 = vld [vmem:[%s3 + $0x20] sm:$0xff]
    %v57 = vld [vmem:[%s3 + $0x28] sm:$0xff]
    %v58 = vld [vmem:[%s3 + $0x30] sm:$0xff]
    %v59 = vld [vmem:[%s3 + $0x38] sm:$0xff]
    %v60 = vld [vmem:[%s3 + $0x40] sm:$0xff]
    %v61 = vld [vmem:[%s3 + $0x48] sm:$0xff]
    %v62 = vld [vmem:[%s3 + $0x50] sm:$0xff]
    %v63 = vld [vmem:[%s3 + $0x58] sm:$0xff]
    %v64 = vld [vmem:[%s3 + $0x60] sm:$0xff]
    %v65 = vld [vmem:[%s3 + $0x68] sm:$0xff]
    %v66 = vld [vmem:[%s3 + $0x70] sm:$0xff]
    %v67 = vld [vmem:[%s3 + $0x78] sm:$0xff]
    %v68 = vld [vmem:[%s3 + $0x80] sm:$0xff]
    %v69 = vld [vmem:[%s3 + $0x88] sm:$0xff]
    %v70 = vld [vmem:[%s3 + $0x90] sm:$0xff]
    %v71 = vld [vmem:[%s3 + $0x98] sm:$0xff]
    %v72 = vld [vmem:[%s3 + $0xa0] sm:$0xff]
    %v73 = vld [vmem:[%s3 + $0xa8] sm:$0xff]
    %v74 = vld [vmem:[%s3 + $0xb0] sm:$0xff]
    %v75 = vld [vmem:[%s3 + $0xb8] sm:$0xff]
    %v76 = vld [vmem:[%s3 + $0xc0] sm:$0xff]
    %v77 = vld [vmem:[%s3 + $0xc8] sm:$0xff]
    %v78 = vld [vmem:[%s3 + $0xd0] sm:$0xff]
    %v79 = vld [vmem:[%s3 + $0xd8] sm:$0xff]
    %v80 = vld [vmem:[%s3 + $0xe0] sm:$0xff]
    %v81 = vld [vmem:[%s3 + $0xe8] sm:$0xff]
    %v82 = vld [vmem:[%s3 + $0xf0] sm:$0xff]
    %v83 = vld [vmem:[%s3 + $0xf8] sm:$0xff]
    %84 = vset.pattern.permute.xlu0 0
    %85 = vperm.xlu0 %84, %v19
    %v86 = vpop.permute.xlu0 %85
    %87 = vset.pattern.permute.xlu0 0
    %88 = vperm.xlu0 %87, %v20
    %v89 = vpop.permute.xlu0 %88
    %90 = vset.pattern.permute.xlu0 0
    %91 = vperm.xlu0 %90, %v21
    %v92 = vpop.permute.xlu0 %91
    %93 = vset.pattern.permute.xlu0 0
    %94 = vperm.xlu0 %93, %v22
    %v95 = vpop.permute.xlu0 %94
    %96 = vset.pattern.permute.xlu0 0
    %97 = vperm.xlu0 %96, %v23
    %v98 = vpop.permute.xlu0 %97
    %99 = vset.pattern.permute.xlu0 0
    %100 = vperm.xlu0 %99, %v24
    %v101 = vpop.permute.xlu0 %100
    %102 = vset.pattern.permute.xlu0 0
    %103 = vperm.xlu0 %102, %v25
    %v104 = vpop.permute.xlu0 %103
    %105 = vset.pattern.permute.xlu0 0
    %106 = vperm.xlu0 %105, %v26
    %v107 = vpop.permute.xlu0 %106
    %108 = vset.pattern.permute.xlu0 0
    %109 = vperm.xlu0 %108, %v27
    %v110 = vpop.permute.xlu0 %109
    %111 = vset.pattern.permute.xlu0 0
    %112 = vperm.xlu0 %111, %v28
    %v113 = vpop.permute.xlu0 %112
    %114 = vset.pattern.permute.xlu0 0
    %115 = vperm.xlu0 %114, %v29
    %v116 = vpop.permute.xlu0 %115
    %117 = vset.pattern.permute.xlu0 0
    %118 = vperm.xlu0 %117, %v30
    %v119 = vpop.permute.xlu0 %118
    %120 = vset.pattern.permute.xlu0 0
    %121 = vperm.xlu0 %120, %v31
    %v122 = vpop.permute.xlu0 %121
    %123 = vset.pattern.permute.xlu0 0
    %124 = vperm.xlu0 %123, %v32
    %v125 = vpop.permute.xlu0 %124
    %126 = vset.pattern.permute.xlu0 0
    %127 = vperm.xlu0 %126, %v33
    %v128 = vpop.permute.xlu0 %127
    %129 = vset.pattern.permute.xlu0 0
    %130 = vperm.xlu0 %129, %v34
    %v131 = vpop.permute.xlu0 %130
    %132 = vset.pattern.permute.xlu0 0
    %133 = vperm.xlu0 %132, %v35
    %v134 = vpop.permute.xlu0 %133
    %135 = vset.pattern.permute.xlu0 0
    %136 = vperm.xlu0 %135, %v36
    %v137 = vpop.permute.xlu0 %136
    %138 = vset.pattern.permute.xlu0 0
    %139 = vperm.xlu0 %138, %v37
    %v140 = vpop.permute.xlu0 %139
    %141 = vset.pattern.permute.xlu0 0
    %142 = vperm.xlu0 %141, %v38
    %v143 = vpop.permute.xlu0 %142
    %144 = vset.pattern.permute.xlu0 0
    %145 = vperm.xlu0 %144, %v39
    %v146 = vpop.permute.xlu0 %145
    %147 = vset.pattern.permute.xlu0 0
    %148 = vperm.xlu0 %147, %v40
    %v149 = vpop.permute.xlu0 %148
    %150 = vset.pattern.permute.xlu0 0
    %151 = vperm.xlu0 %150, %v41
    %v152 = vpop.permute.xlu0 %151
    %153 = vset.pattern.permute.xlu0 0
    %154 = vperm.xlu0 %153, %v42
    %v155 = vpop.permute.xlu0 %154
    %156 = vset.pattern.permute.xlu0 0
    %157 = vperm.xlu0 %156, %v43
    %v158 = vpop.permute.xlu0 %157
    %159 = vset.pattern.permute.xlu0 0
    %160 = vperm.xlu0 %159, %v44
    %v161 = vpop.permute.xlu0 %160
    %162 = vset.pattern.permute.xlu0 0
    %163 = vperm.xlu0 %162, %v45
    %v164 = vpop.permute.xlu0 %163
    %165 = vset.pattern.permute.xlu0 0
    %166 = vperm.xlu0 %165, %v46
    %v167 = vpop.permute.xlu0 %166
    %168 = vset.pattern.permute.xlu0 0
    %169 = vperm.xlu0 %168, %v47
    %v170 = vpop.permute.xlu0 %169
    %171 = vset.pattern.permute.xlu0 0
    %172 = vperm.xlu0 %171, %v48
    %v173 = vpop.permute.xlu0 %172
    %174 = vset.pattern.permute.xlu0 0
    %175 = vperm.xlu0 %174, %v49
    %v176 = vpop.permute.xlu0 %175
    %177 = vset.pattern.permute.xlu0 0
    %178 = vperm.xlu0 %177, %v50
    %v179 = vpop.permute.xlu0 %178
    %v180 = vlaneseq
    %v181 = vshrl.u32 %v180, 7
    %v182 = vsub.s32 0, %v181
    %v183 = vrot.slane %v18, %v182
    %v184 = vlaneseq
    %v185 = vshrl.u32 %v184, 7
    %v186 = vsub.s32 1, %v185
    %v187 = vrot.slane %v18, %v186
    %vm188 = vcmp.eq.s32.totalorder %v86, %v183
    %vm189 = vcmp.eq.s32.totalorder %v86, %v187
    %vm190 = vcmp.eq.s32.totalorder %v89, %v183
    %vm191 = vcmp.eq.s32.totalorder %v89, %v187
    %vm192 = vcmp.eq.s32.totalorder %v92, %v183
    %vm193 = vcmp.eq.s32.totalorder %v92, %v187
    %vm194 = vcmp.eq.s32.totalorder %v95, %v183
    %vm195 = vcmp.eq.s32.totalorder %v95, %v187
    %vm196 = vcmp.eq.s32.totalorder %v98, %v183
    %vm197 = vcmp.eq.s32.totalorder %v98, %v187
    %vm198 = vcmp.eq.s32.totalorder %v101, %v183
    %vm199 = vcmp.eq.s32.totalorder %v101, %v187
    %vm200 = vcmp.eq.s32.totalorder %v104, %v183
    %vm201 = vcmp.eq.s32.totalorder %v104, %v187
    %vm202 = vcmp.eq.s32.totalorder %v107, %v183
    %vm203 = vcmp.eq.s32.totalorder %v107, %v187
    %vm204 = vcmp.eq.s32.totalorder %v110, %v183
    %vm205 = vcmp.eq.s32.totalorder %v110, %v187
    %vm206 = vcmp.eq.s32.totalorder %v113, %v183
    %vm207 = vcmp.eq.s32.totalorder %v113, %v187
    %vm208 = vcmp.eq.s32.totalorder %v116, %v183
    %vm209 = vcmp.eq.s32.totalorder %v116, %v187
    %vm210 = vcmp.eq.s32.totalorder %v119, %v183
    %vm211 = vcmp.eq.s32.totalorder %v119, %v187
    %vm212 = vcmp.eq.s32.totalorder %v122, %v183
    %vm213 = vcmp.eq.s32.totalorder %v122, %v187
    %vm214 = vcmp.eq.s32.totalorder %v125, %v183
    %vm215 = vcmp.eq.s32.totalorder %v125, %v187
    %vm216 = vcmp.eq.s32.totalorder %v128, %v183
    %vm217 = vcmp.eq.s32.totalorder %v128, %v187
    %vm218 = vcmp.eq.s32.totalorder %v131, %v183
    %vm219 = vcmp.eq.s32.totalorder %v131, %v187
    %vm220 = vcmp.eq.s32.totalorder %v134, %v183
    %vm221 = vcmp.eq.s32.totalorder %v134, %v187
    %vm222 = vcmp.eq.s32.totalorder %v137, %v183
    %vm223 = vcmp.eq.s32.totalorder %v137, %v187
    %vm224 = vcmp.eq.s32.totalorder %v140, %v183
    %vm225 = vcmp.eq.s32.totalorder %v140, %v187
    %vm226 = vcmp.eq.s32.totalorder %v143, %v183
    %vm227 = vcmp.eq.s32.totalorder %v143, %v187
    %vm228 = vcmp.eq.s32.totalorder %v146, %v183
    %vm229 = vcmp.eq.s32.totalorder %v146, %v187
    %vm230 = vcmp.eq.s32.totalorder %v149, %v183
    %vm231 = vcmp.eq.s32.totalorder %v149, %v187
    %vm232 = vcmp.eq.s32.totalorder %v152, %v183
    %vm233 = vcmp.eq.s32.totalorder %v152, %v187
    %vm234 = vcmp.eq.s32.totalorder %v155, %v183
    %vm235 = vcmp.eq.s32.totalorder %v155, %v187
    %vm236 = vcmp.eq.s32.totalorder %v158, %v183
    %vm237 = vcmp.eq.s32.totalorder %v158, %v187
    %vm238 = vcmp.eq.s32.totalorder %v161, %v183
    %vm239 = vcmp.eq.s32.totalorder %v161, %v187
    %vm240 = vcmp.eq.s32.totalorder %v164, %v183
    %vm241 = vcmp.eq.s32.totalorder %v164, %v187
    %vm242 = vcmp.eq.s32.totalorder %v167, %v183
    %vm243 = vcmp.eq.s32.totalorder %v167, %v187
    %vm244 = vcmp.eq.s32.totalorder %v170, %v183
    %vm245 = vcmp.eq.s32.totalorder %v170, %v187
    %vm246 = vcmp.eq.s32.totalorder %v173, %v183
    %vm247 = vcmp.eq.s32.totalorder %v173, %v187
    %vm248 = vcmp.eq.s32.totalorder %v176, %v183
    %vm249 = vcmp.eq.s32.totalorder %v176, %v187
    %vm250 = vcmp.eq.s32.totalorder %v179, %v183
    %vm251 = vcmp.eq.s32.totalorder %v179, %v187
    %v252 = vsel %vm188, 1, 0
    %v253 = vsel %vm189, 1, 0
    %v254 = vsel %vm190, 1, 0
    %v255 = vsel %vm191, 1, 0
    %v256 = vsel %vm192, 1, 0
    %v257 = vsel %vm193, 1, 0
    %v258 = vsel %vm194, 1, 0
    %v259 = vsel %vm195, 1, 0
    %v260 = vsel %vm196, 1, 0
    %v261 = vsel %vm197, 1, 0
    %v262 = vsel %vm198, 1, 0
    %v263 = vsel %vm199, 1, 0
    %v264 = vsel %vm200, 1, 0
    %v265 = vsel %vm201, 1, 0
    %v266 = vsel %vm202, 1, 0
    %v267 = vsel %vm203, 1, 0
    %v268 = vsel %vm204, 1, 0
    %v269 = vsel %vm205, 1, 0
    %v270 = vsel %vm206, 1, 0
    %v271 = vsel %vm207, 1, 0
    %v272 = vsel %vm208, 1, 0
    %v273 = vsel %vm209, 1, 0
    %v274 = vsel %vm210, 1, 0
    %v275 = vsel %vm211, 1, 0
    %v276 = vsel %vm212, 1, 0
    %v277 = vsel %vm213, 1, 0
    %v278 = vsel %vm214, 1, 0
    %v279 = vsel %vm215, 1, 0
    %v280 = vsel %vm216, 1, 0
    %v281 = vsel %vm217, 1, 0
    %v282 = vsel %vm218, 1, 0
    %v283 = vsel %vm219, 1, 0
    %v284 = vsel %vm220, 1, 0
    %v285 = vsel %vm221, 1, 0
    %v286 = vsel %vm222, 1, 0
    %v287 = vsel %vm223, 1, 0
    %v288 = vsel %vm224, 1, 0
    %v289 = vsel %vm225, 1, 0
    %v290 = vsel %vm226, 1, 0
    %v291 = vsel %vm227, 1, 0
    %v292 = vsel %vm228, 1, 0
    %v293 = vsel %vm229, 1, 0
    %v294 = vsel %vm230, 1, 0
    %v295 = vsel %vm231, 1, 0
    %v296 = vsel %vm232, 1, 0
    %v297 = vsel %vm233, 1, 0
    %v298 = vsel %vm234, 1, 0
    %v299 = vsel %vm235, 1, 0
    %v300 = vsel %vm236, 1, 0
    %v301 = vsel %vm237, 1, 0
    %v302 = vsel %vm238, 1, 0
    %v303 = vsel %vm239, 1, 0
    %v304 = vsel %vm240, 1, 0
    %v305 = vsel %vm241, 1, 0
    %v306 = vsel %vm242, 1, 0
    %v307 = vsel %vm243, 1, 0
    %v308 = vsel %vm244, 1, 0
    %v309 = vsel %vm245, 1, 0
    %v310 = vsel %vm246, 1, 0
    %v311 = vsel %vm247, 1, 0
    %v312 = vsel %vm248, 1, 0
    %v313 = vsel %vm249, 1, 0
    %v314 = vsel %vm250, 1, 0
    %v315 = vsel %vm251, 1, 0
    %v316 = vcvt.s32.f32 %v252
    %v317 = vcvt.s32.f32 %v253
    %v318 = vcvt.s32.f32 %v254
    %v319 = vcvt.s32.f32 %v255
    %v320 = vcvt.s32.f32 %v256
    %v321 = vcvt.s32.f32 %v257
    %v322 = vcvt.s32.f32 %v258
    %v323 = vcvt.s32.f32 %v259
    %v324 = vcvt.s32.f32 %v260
    %v325 = vcvt.s32.f32 %v261
    %v326 = vcvt.s32.f32 %v262
    %v327 = vcvt.s32.f32 %v263
    %v328 = vcvt.s32.f32 %v264
    %v329 = vcvt.s32.f32 %v265
    %v330 = vcvt.s32.f32 %v266
    %v331 = vcvt.s32.f32 %v267
    %v332 = vcvt.s32.f32 %v268
    %v333 = vcvt.s32.f32 %v269
    %v334 = vcvt.s32.f32 %v270
    %v335 = vcvt.s32.f32 %v271
    %v336 = vcvt.s32.f32 %v272
    %v337 = vcvt.s32.f32 %v273
    %v338 = vcvt.s32.f32 %v274
    %v339 = vcvt.s32.f32 %v275
    %v340 = vcvt.s32.f32 %v276
    %v341 = vcvt.s32.f32 %v277
    %v342 = vcvt.s32.f32 %v278
    %v343 = vcvt.s32.f32 %v279
    %v344 = vcvt.s32.f32 %v280
    %v345 = vcvt.s32.f32 %v281
    %v346 = vcvt.s32.f32 %v282
    %v347 = vcvt.s32.f32 %v283
    %v348 = vcvt.s32.f32 %v284
    %v349 = vcvt.s32.f32 %v285
    %v350 = vcvt.s32.f32 %v286
    %v351 = vcvt.s32.f32 %v287
    %v352 = vcvt.s32.f32 %v288
    %v353 = vcvt.s32.f32 %v289
    %v354 = vcvt.s32.f32 %v290
    %v355 = vcvt.s32.f32 %v291
    %v356 = vcvt.s32.f32 %v292
    %v357 = vcvt.s32.f32 %v293
    %v358 = vcvt.s32.f32 %v294
    %v359 = vcvt.s32.f32 %v295
    %v360 = vcvt.s32.f32 %v296
    %v361 = vcvt.s32.f32 %v297
    %v362 = vcvt.s32.f32 %v298
    %v363 = vcvt.s32.f32 %v299
    %v364 = vcvt.s32.f32 %v300
    %v365 = vcvt.s32.f32 %v301
    %v366 = vcvt.s32.f32 %v302
    %v367 = vcvt.s32.f32 %v303
    %v368 = vcvt.s32.f32 %v304
    %v369 = vcvt.s32.f32 %v305
    %v370 = vcvt.s32.f32 %v306
    %v371 = vcvt.s32.f32 %v307
    %v372 = vcvt.s32.f32 %v308
    %v373 = vcvt.s32.f32 %v309
    %v374 = vcvt.s32.f32 %v310
    %v375 = vcvt.s32.f32 %v311
    %v376 = vcvt.s32.f32 %v312
    %v377 = vcvt.s32.f32 %v313
    %v378 = vcvt.s32.f32 %v314
    %v379 = vcvt.s32.f32 %v315
    %380 = vset.pattern.permute.xlu0 0
    %381 = vperm.xlu0 %380, %v52
    %v382 = vpop.permute.xlu0 %381
    %383 = vset.pattern.permute.xlu0 0
    %384 = vperm.xlu0 %383, %v53
    %v385 = vpop.permute.xlu0 %384
    %386 = vset.pattern.permute.xlu0 0
    %387 = vperm.xlu0 %386, %v54
    %v388 = vpop.permute.xlu0 %387
    %389 = vset.pattern.permute.xlu0 0
    %390 = vperm.xlu0 %389, %v55
    %v391 = vpop.permute.xlu0 %390
    %392 = vset.pattern.permute.xlu0 0
    %393 = vperm.xlu0 %392, %v56
    %v394 = vpop.permute.xlu0 %393
    %395 = vset.pattern.permute.xlu0 0
    %396 = vperm.xlu0 %395, %v57
    %v397 = vpop.permute.xlu0 %396
    %398 = vset.pattern.permute.xlu0 0
    %399 = vperm.xlu0 %398, %v58
    %v400 = vpop.permute.xlu0 %399
    %401 = vset.pattern.permute.xlu0 0
    %402 = vperm.xlu0 %401, %v59
    %v403 = vpop.permute.xlu0 %402
    %404 = vset.pattern.permute.xlu0 0
    %405 = vperm.xlu0 %404, %v60
    %v406 = vpop.permute.xlu0 %405
    %407 = vset.pattern.permute.xlu0 0
    %408 = vperm.xlu0 %407, %v61
    %v409 = vpop.permute.xlu0 %408
    %410 = vset.pattern.permute.xlu0 0
    %411 = vperm.xlu0 %410, %v62
    %v412 = vpop.permute.xlu0 %411
    %413 = vset.pattern.permute.xlu0 0
    %414 = vperm.xlu0 %413, %v63
    %v415 = vpop.permute.xlu0 %414
    %416 = vset.pattern.permute.xlu0 0
    %417 = vperm.xlu0 %416, %v64
    %v418 = vpop.permute.xlu0 %417
    %419 = vset.pattern.permute.xlu0 0
    %420 = vperm.xlu0 %419, %v65
    %v421 = vpop.permute.xlu0 %420
    %422 = vset.pattern.permute.xlu0 0
    %423 = vperm.xlu0 %422, %v66
    %v424 = vpop.permute.xlu0 %423
    %425 = vset.pattern.permute.xlu0 0
    %426 = vperm.xlu0 %425, %v67
    %v427 = vpop.permute.xlu0 %426
    %428 = vset.pattern.permute.xlu0 0
    %429 = vperm.xlu0 %428, %v68
    %v430 = vpop.permute.xlu0 %429
    %431 = vset.pattern.permute.xlu0 0
    %432 = vperm.xlu0 %431, %v69
    %v433 = vpop.permute.xlu0 %432
    %434 = vset.pattern.permute.xlu0 0
    %435 = vperm.xlu0 %434, %v70
    %v436 = vpop.permute.xlu0 %435
    %437 = vset.pattern.permute.xlu0 0
    %438 = vperm.xlu0 %437, %v71
    %v439 = vpop.permute.xlu0 %438
    %440 = vset.pattern.permute.xlu0 0
    %441 = vperm.xlu0 %440, %v72
    %v442 = vpop.permute.xlu0 %441
    %443 = vset.pattern.permute.xlu0 0
    %444 = vperm.xlu0 %443, %v73
    %v445 = vpop.permute.xlu0 %444
    %446 = vset.pattern.permute.xlu0 0
    %447 = vperm.xlu0 %446, %v74
    %v448 = vpop.permute.xlu0 %447
    %449 = vset.pattern.permute.xlu0 0
    %450 = vperm.xlu0 %449, %v75
    %v451 = vpop.permute.xlu0 %450
    %452 = vset.pattern.permute.xlu0 0
    %453 = vperm.xlu0 %452, %v76
    %v454 = vpop.permute.xlu0 %453
    %455 = vset.pattern.permute.xlu0 0
    %456 = vperm.xlu0 %455, %v77
    %v457 = vpop.permute.xlu0 %456
    %458 = vset.pattern.permute.xlu0 0
    %459 = vperm.xlu0 %458, %v78
    %v460 = vpop.permute.xlu0 %459
    %461 = vset.pattern.permute.xlu0 0
    %462 = vperm.xlu0 %461, %v79
    %v463 = vpop.permute.xlu0 %462
    %464 = vset.pattern.permute.xlu0 0
    %465 = vperm.xlu0 %464, %v80
    %v466 = vpop.permute.xlu0 %465
    %467 = vset.pattern.permute.xlu0 0
    %468 = vperm.xlu0 %467, %v81
    %v469 = vpop.permute.xlu0 %468
    %470 = vset.pattern.permute.xlu0 0
    %471 = vperm.xlu0 %470, %v82
    %v472 = vpop.permute.xlu0 %471
    %473 = vset.pattern.permute.xlu0 0
    %474 = vperm.xlu0 %473, %v83
    %v475 = vpop.permute.xlu0 %474
    %v476 = vlaneseq
    %v477 = vshrl.u32 %v476, 7
    %v478 = vsub.s32 0, %v477
    %v479 = vrot.slane %v51, %v478
    %v480 = vlaneseq
    %v481 = vshrl.u32 %v480, 7
    %v482 = vsub.s32 1, %v481
    %v483 = vrot.slane %v51, %v482
    %vm484 = vcmp.eq.s32.totalorder %v382, %v479
    %vm485 = vcmp.eq.s32.totalorder %v382, %v483
    %vm486 = vcmp.eq.s32.totalorder %v385, %v479
    %vm487 = vcmp.eq.s32.totalorder %v385, %v483
    %vm488 = vcmp.eq.s32.totalorder %v388, %v479
    %vm489 = vcmp.eq.s32.totalorder %v388, %v483
    %vm490 = vcmp.eq.s32.totalorder %v391, %v479
    %vm491 = vcmp.eq.s32.totalorder %v391, %v483
    %vm492 = vcmp.eq.s32.totalorder %v394, %v479
    %vm493 = vcmp.eq.s32.totalorder %v394, %v483
    %vm494 = vcmp.eq.s32.totalorder %v397, %v479
    %vm495 = vcmp.eq.s32.totalorder %v397, %v483
    %vm496 = vcmp.eq.s32.totalorder %v400, %v479
    %vm497 = vcmp.eq.s32.totalorder %v400, %v483
    %vm498 = vcmp.eq.s32.totalorder %v403, %v479
    %vm499 = vcmp.eq.s32.totalorder %v403, %v483
    %vm500 = vcmp.eq.s32.totalorder %v406, %v479
    %vm501 = vcmp.eq.s32.totalorder %v406, %v483
    %vm502 = vcmp.eq.s32.totalorder %v409, %v479
    %vm503 = vcmp.eq.s32.totalorder %v409, %v483
    %vm504 = vcmp.eq.s32.totalorder %v412, %v479
    %vm505 = vcmp.eq.s32.totalorder %v412, %v483
    %vm506 = vcmp.eq.s32.totalorder %v415, %v479
    %vm507 = vcmp.eq.s32.totalorder %v415, %v483
    %vm508 = vcmp.eq.s32.totalorder %v418, %v479
    %vm509 = vcmp.eq.s32.totalorder %v418, %v483
    %vm510 = vcmp.eq.s32.totalorder %v421, %v479
    %vm511 = vcmp.eq.s32.totalorder %v421, %v483
    %vm512 = vcmp.eq.s32.totalorder %v424, %v479
    %vm513 = vcmp.eq.s32.totalorder %v424, %v483
    %vm514 = vcmp.eq.s32.totalorder %v427, %v479
    %vm515 = vcmp.eq.s32.totalorder %v427, %v483
    %vm516 = vcmp.eq.s32.totalorder %v430, %v479
    %vm517 = vcmp.eq.s32.totalorder %v430, %v483
    %vm518 = vcmp.eq.s32.totalorder %v433, %v479
    %vm519 = vcmp.eq.s32.totalorder %v433, %v483
    %vm520 = vcmp.eq.s32.totalorder %v436, %v479
    %vm521 = vcmp.eq.s32.totalorder %v436, %v483
    %vm522 = vcmp.eq.s32.totalorder %v439, %v479
    %vm523 = vcmp.eq.s32.totalorder %v439, %v483
    %vm524 = vcmp.eq.s32.totalorder %v442, %v479
    %vm525 = vcmp.eq.s32.totalorder %v442, %v483
    %vm526 = vcmp.eq.s32.totalorder %v445, %v479
    %vm527 = vcmp.eq.s32.totalorder %v445, %v483
    %vm528 = vcmp.eq.s32.totalorder %v448, %v479
    %vm529 = vcmp.eq.s32.totalorder %v448, %v483
    %vm530 = vcmp.eq.s32.totalorder %v451, %v479
    %vm531 = vcmp.eq.s32.totalorder %v451, %v483
    %vm532 = vcmp.eq.s32.totalorder %v454, %v479
    %vm533 = vcmp.eq.s32.totalorder %v454, %v483
    %vm534 = vcmp.eq.s32.totalorder %v457, %v479
    %vm535 = vcmp.eq.s32.totalorder %v457, %v483
    %vm536 = vcmp.eq.s32.totalorder %v460, %v479
    %vm537 = vcmp.eq.s32.totalorder %v460, %v483
    %vm538 = vcmp.eq.s32.totalorder %v463, %v479
    %vm539 = vcmp.eq.s32.totalorder %v463, %v483
    %vm540 = vcmp.eq.s32.totalorder %v466, %v479
    %vm541 = vcmp.eq.s32.totalorder %v466, %v483
    %vm542 = vcmp.eq.s32.totalorder %v469, %v479
    %vm543 = vcmp.eq.s32.totalorder %v469, %v483
    %vm544 = vcmp.eq.s32.totalorder %v472, %v479
    %vm545 = vcmp.eq.s32.totalorder %v472, %v483
    %vm546 = vcmp.eq.s32.totalorder %v475, %v479
    %vm547 = vcmp.eq.s32.totalorder %v475, %v483
    %v548 = vsel %vm484, 1, 0
    %v549 = vsel %vm485, 1, 0
    %v550 = vsel %vm486, 1, 0
    %v551 = vsel %vm487, 1, 0
    %v552 = vsel %vm488, 1, 0
    %v553 = vsel %vm489, 1, 0
    %v554 = vsel %vm490, 1, 0
    %v555 = vsel %vm491, 1, 0
    %v556 = vsel %vm492, 1, 0
    %v557 = vsel %vm493, 1, 0
    %v558 = vsel %vm494, 1, 0
    %v559 = vsel %vm495, 1, 0
    %v560 = vsel %vm496, 1, 0
    %v561 = vsel %vm497, 1, 0
    %v562 = vsel %vm498, 1, 0
    %v563 = vsel %vm499, 1, 0
    %v564 = vsel %vm500, 1, 0
    %v565 = vsel %vm501, 1, 0
    %v566 = vsel %vm502, 1, 0
    %v567 = vsel %vm503, 1, 0
    %v568 = vsel %vm504, 1, 0
    %v569 = vsel %vm505, 1, 0
    %v570 = vsel %vm506, 1, 0
    %v571 = vsel %vm507, 1, 0
    %v572 = vsel %vm508, 1, 0
    %v573 = vsel %vm509, 1, 0
    %v574 = vsel %vm510, 1, 0
    %v575 = vsel %vm511, 1, 0
    %v576 = vsel %vm512, 1, 0
    %v577 = vsel %vm513, 1, 0
    %v578 = vsel %vm514, 1, 0
    %v579 = vsel %vm515, 1, 0
    %v580 = vsel %vm516, 1, 0
    %v581 = vsel %vm517, 1, 0
    %v582 = vsel %vm518, 1, 0
    %v583 = vsel %vm519, 1, 0
    %v584 = vsel %vm520, 1, 0
    %v585 = vsel %vm521, 1, 0
    %v586 = vsel %vm522, 1, 0
    %v587 = vsel %vm523, 1, 0
    %v588 = vsel %vm524, 1, 0
    %v589 = vsel %vm525, 1, 0
    %v590 = vsel %vm526, 1, 0
    %v591 = vsel %vm527, 1, 0
    %v592 = vsel %vm528, 1, 0
    %v593 = vsel %vm529, 1, 0
    %v594 = vsel %vm530, 1, 0
    %v595 = vsel %vm531, 1, 0
    %v596 = vsel %vm532, 1, 0
    %v597 = vsel %vm533, 1, 0
    %v598 = vsel %vm534, 1, 0
    %v599 = vsel %vm535, 1, 0
    %v600 = vsel %vm536, 1, 0
    %v601 = vsel %vm537, 1, 0
    %v602 = vsel %vm538, 1, 0
    %v603 = vsel %vm539, 1, 0
    %v604 = vsel %vm540, 1, 0
    %v605 = vsel %vm541, 1, 0
    %v606 = vsel %vm542, 1, 0
    %v607 = vsel %vm543, 1, 0
    %v608 = vsel %vm544, 1, 0
    %v609 = vsel %vm545, 1, 0
    %v610 = vsel %vm546, 1, 0
    %v611 = vsel %vm547, 1, 0
    %v612 = vcvt.s32.f32 %v548
    %v613 = vcvt.s32.f32 %v549
    %v614 = vcvt.s32.f32 %v550
    %v615 = vcvt.s32.f32 %v551
    %v616 = vcvt.s32.f32 %v552
    %v617 = vcvt.s32.f32 %v553
    %v618 = vcvt.s32.f32 %v554
    %v619 = vcvt.s32.f32 %v555
    %v620 = vcvt.s32.f32 %v556
    %v621 = vcvt.s32.f32 %v557
    %v622 = vcvt.s32.f32 %v558
    %v623 = vcvt.s32.f32 %v559
    %v624 = vcvt.s32.f32 %v560
    %v625 = vcvt.s32.f32 %v561
    %v626 = vcvt.s32.f32 %v562
    %v627 = vcvt.s32.f32 %v563
    %v628 = vcvt.s32.f32 %v564
    %v629 = vcvt.s32.f32 %v565
    %v630 = vcvt.s32.f32 %v566
    %v631 = vcvt.s32.f32 %v567
    %v632 = vcvt.s32.f32 %v568
    %v633 = vcvt.s32.f32 %v569
    %v634 = vcvt.s32.f32 %v570
    %v635 = vcvt.s32.f32 %v571
    %v636 = vcvt.s32.f32 %v572
    %v637 = vcvt.s32.f32 %v573
    %v638 = vcvt.s32.f32 %v574
    %v639 = vcvt.s32.f32 %v575
    %v640 = vcvt.s32.f32 %v576
    %v641 = vcvt.s32.f32 %v577
    %v642 = vcvt.s32.f32 %v578
    %v643 = vcvt.s32.f32 %v579
    %v644 = vcvt.s32.f32 %v580
    %v645 = vcvt.s32.f32 %v581
    %v646 = vcvt.s32.f32 %v582
    %v647 = vcvt.s32.f32 %v583
    %v648 = vcvt.s32.f32 %v584
    %v649 = vcvt.s32.f32 %v585
    %v650 = vcvt.s32.f32 %v586
    %v651 = vcvt.s32.f32 %v587
    %v652 = vcvt.s32.f32 %v588
    %v653 = vcvt.s32.f32 %v589
    %v654 = vcvt.s32.f32 %v590
    %v655 = vcvt.s32.f32 %v591
    %v656 = vcvt.s32.f32 %v592
    %v657 = vcvt.s32.f32 %v593
    %v658 = vcvt.s32.f32 %v594
    %v659 = vcvt.s32.f32 %v595
    %v660 = vcvt.s32.f32 %v596
    %v661 = vcvt.s32.f32 %v597
    %v662 = vcvt.s32.f32 %v598
    %v663 = vcvt.s32.f32 %v599
    %v664 = vcvt.s32.f32 %v600
    %v665 = vcvt.s32.f32 %v601
    %v666 = vcvt.s32.f32 %v602
    %v667 = vcvt.s32.f32 %v603
    %v668 = vcvt.s32.f32 %v604
    %v669 = vcvt.s32.f32 %v605
    %v670 = vcvt.s32.f32 %v606
    %v671 = vcvt.s32.f32 %v607
    %v672 = vcvt.s32.f32 %v608
    %v673 = vcvt.s32.f32 %v609
    %v674 = vcvt.s32.f32 %v610
    %v675 = vcvt.s32.f32 %v611
    %v676 = vmul.f32 %v316, %v612
    %v677 = vmul.f32 %v317, %v613
    %v678 = vmul.f32 %v318, %v614
    %v679 = vmul.f32 %v319, %v615
    %v680 = vmul.f32 %v320, %v616
    %v681 = vmul.f32 %v321, %v617
    %v682 = vmul.f32 %v322, %v618
    %v683 = vmul.f32 %v323, %v619
    %v684 = vmul.f32 %v324, %v620
    %v685 = vmul.f32 %v325, %v621
    %v686 = vmul.f32 %v326, %v622
    %v687 = vmul.f32 %v327, %v623
    %v688 = vmul.f32 %v328, %v624
    %v689 = vmul.f32 %v329, %v625
    %v690 = vmul.f32 %v330, %v626
    %v691 = vmul.f32 %v331, %v627
    %v692 = vmul.f32 %v332, %v628
    %v693 = vmul.f32 %v333, %v629
    %v694 = vmul.f32 %v334, %v630
    %v695 = vmul.f32 %v335, %v631
    %v696 = vmul.f32 %v336, %v632
    %v697 = vmul.f32 %v337, %v633
    %v698 = vmul.f32 %v338, %v634
    %v699 = vmul.f32 %v339, %v635
    %v700 = vmul.f32 %v340, %v636
    %v701 = vmul.f32 %v341, %v637
    %v702 = vmul.f32 %v342, %v638
    %v703 = vmul.f32 %v343, %v639
    %v704 = vmul.f32 %v344, %v640
    %v705 = vmul.f32 %v345, %v641
    %v706 = vmul.f32 %v346, %v642
    %v707 = vmul.f32 %v347, %v643
    %v708 = vmul.f32 %v348, %v644
    %v709 = vmul.f32 %v349, %v645
    %v710 = vmul.f32 %v350, %v646
    %v711 = vmul.f32 %v351, %v647
    %v712 = vmul.f32 %v352, %v648
    %v713 = vmul.f32 %v353, %v649
    %v714 = vmul.f32 %v354, %v650
    %v715 = vmul.f32 %v355, %v651
    %v716 = vmul.f32 %v356, %v652
    %v717 = vmul.f32 %v357, %v653
    %v718 = vmul.f32 %v358, %v654
    %v719 = vmul.f32 %v359, %v655
    %v720 = vmul.f32 %v360, %v656
    %v721 = vmul.f32 %v361, %v657
    %v722 = vmul.f32 %v362, %v658
    %v723 = vmul.f32 %v363, %v659
    %v724 = vmul.f32 %v364, %v660
    %v725 = vmul.f32 %v365, %v661
    %v726 = vmul.f32 %v366, %v662
    %v727 = vmul.f32 %v367, %v663
    %v728 = vmul.f32 %v368, %v664
    %v729 = vmul.f32 %v369, %v665
    %v730 = vmul.f32 %v370, %v666
    %v731 = vmul.f32 %v371, %v667
    %v732 = vmul.f32 %v372, %v668
    %v733 = vmul.f32 %v373, %v669
    %v734 = vmul.f32 %v374, %v670
    %v735 = vmul.f32 %v375, %v671
    %v736 = vmul.f32 %v376, %v672
    %v737 = vmul.f32 %v377, %v673
    %v738 = vmul.f32 %v378, %v674
    %v739 = vmul.f32 %v379, %v675
    %v740 = vadd.f32 %v676, %v677
    %v741 = vadd.f32 %v740, %v678
    %v742 = vadd.f32 %v741, %v679
    %v743 = vadd.f32 %v742, %v680
    %v744 = vadd.f32 %v743, %v681
    %v745 = vadd.f32 %v744, %v682
    %v746 = vadd.f32 %v745, %v683
    %v747 = vadd.f32 %v746, %v684
    %v748 = vadd.f32 %v747, %v685
    %v749 = vadd.f32 %v748, %v686
    %v750 = vadd.f32 %v749, %v687
    %v751 = vadd.f32 %v750, %v688
    %v752 = vadd.f32 %v751, %v689
    %v753 = vadd.f32 %v752, %v690
    %v754 = vadd.f32 %v753, %v691
    %v755 = vadd.f32 %v754, %v692
    %v756 = vadd.f32 %v755, %v693
    %v757 = vadd.f32 %v756, %v694
    %v758 = vadd.f32 %v757, %v695
    %v759 = vadd.f32 %v758, %v696
    %v760 = vadd.f32 %v759, %v697
    %v761 = vadd.f32 %v760, %v698
    %v762 = vadd.f32 %v761, %v699
    %v763 = vadd.f32 %v762, %v700
    %v764 = vadd.f32 %v763, %v701
    %v765 = vadd.f32 %v764, %v702
    %v766 = vadd.f32 %v765, %v703
    %v767 = vadd.f32 %v766, %v704
    %v768 = vadd.f32 %v767, %v705
    %v769 = vadd.f32 %v768, %v706
    %v770 = vadd.f32 %v769, %v707
    %v771 = vadd.f32 %v770, %v708
    %v772 = vadd.f32 %v771, %v709
    %v773 = vadd.f32 %v772, %v710
    %v774 = vadd.f32 %v773, %v711
    %v775 = vadd.f32 %v774, %v712
    %v776 = vadd.f32 %v775, %v713
    %v777 = vadd.f32 %v776, %v714
    %v778 = vadd.f32 %v777, %v715
    %v779 = vadd.f32 %v778, %v716
    %v780 = vadd.f32 %v779, %v717
    %v781 = vadd.f32 %v780, %v718
    %v782 = vadd.f32 %v781, %v719
    %v783 = vadd.f32 %v782, %v720
    %v784 = vadd.f32 %v783, %v721
    %v785 = vadd.f32 %v784, %v722
    %v786 = vadd.f32 %v785, %v723
    %v787 = vadd.f32 %v786, %v724
    %v788 = vadd.f32 %v787, %v725
    %v789 = vadd.f32 %v788, %v726
    %v790 = vadd.f32 %v789, %v727
    %v791 = vadd.f32 %v790, %v728
    %v792 = vadd.f32 %v791, %v729
    %v793 = vadd.f32 %v792, %v730
    %v794 = vadd.f32 %v793, %v731
    %v795 = vadd.f32 %v794, %v732
    %v796 = vadd.f32 %v795, %v733
    %v797 = vadd.f32 %v796, %v734
    %v798 = vadd.f32 %v797, %v735
    %v799 = vadd.f32 %v798, %v736
    %v800 = vadd.f32 %v799, %v737
    %v801 = vadd.f32 %v800, %v738
    %v802 = vadd.f32 %v801, %v739
    %803 = vadd.xlane.f32.xlu0 %v802
    %v804 = vpop.xlane.xlu0 %803
    %v805 = vrot.slane %v804, 4
    %v806 = vadd.f32 %v804, %v805
    %v807 = vrot.slane %v806, 2
    %v808 = vadd.f32 %v806, %v807
    %v809 = vrot.slane %v808, 1
    %v810 = vadd.f32 %v808, %v809
    %s811 = vtos %v810
    %v812 = vadd.f32 %v316, %v317
    %v813 = vadd.f32 %v812, %v318
    %v814 = vadd.f32 %v813, %v319
    %v815 = vadd.f32 %v814, %v320
    %v816 = vadd.f32 %v815, %v321
    %v817 = vadd.f32 %v816, %v322
    %v818 = vadd.f32 %v817, %v323
    %v819 = vadd.f32 %v818, %v324
    %v820 = vadd.f32 %v819, %v325
    %v821 = vadd.f32 %v820, %v326
    %v822 = vadd.f32 %v821, %v327
    %v823 = vadd.f32 %v822, %v328
    %v824 = vadd.f32 %v823, %v329
    %v825 = vadd.f32 %v824, %v330
    %v826 = vadd.f32 %v825, %v331
    %v827 = vadd.f32 %v826, %v332
    %v828 = vadd.f32 %v827, %v333
    %v829 = vadd.f32 %v828, %v334
    %v830 = vadd.f32 %v829, %v335
    %v831 = vadd.f32 %v830, %v336
    %v832 = vadd.f32 %v831, %v337
    %v833 = vadd.f32 %v832, %v338
    %v834 = vadd.f32 %v833, %v339
    %v835 = vadd.f32 %v834, %v340
    %v836 = vadd.f32 %v835, %v341
    %v837 = vadd.f32 %v836, %v342
    %v838 = vadd.f32 %v837, %v343
    %v839 = vadd.f32 %v838, %v344
    %v840 = vadd.f32 %v839, %v345
    %v841 = vadd.f32 %v840, %v346
    %v842 = vadd.f32 %v841, %v347
    %v843 = vadd.f32 %v842, %v348
    %v844 = vadd.f32 %v843, %v349
    %v845 = vadd.f32 %v844, %v350
    %v846 = vadd.f32 %v845, %v351
    %v847 = vadd.f32 %v846, %v352
    %v848 = vadd.f32 %v847, %v353
    %v849 = vadd.f32 %v848, %v354
    %v850 = vadd.f32 %v849, %v355
    %v851 = vadd.f32 %v850, %v356
    %v852 = vadd.f32 %v851, %v357
    %v853 = vadd.f32 %v852, %v358
    %v854 = vadd.f32 %v853, %v359
    %v855 = vadd.f32 %v854, %v360
    %v856 = vadd.f32 %v855, %v361
    %v857 = vadd.f32 %v856, %v362
    %v858 = vadd.f32 %v857, %v363
    %v859 = vadd.f32 %v858, %v364
    %v860 = vadd.f32 %v859, %v365
    %v861 = vadd.f32 %v860, %v366
    %v862 = vadd.f32 %v861, %v367
    %v863 = vadd.f32 %v862, %v368
    %v864 = vadd.f32 %v863, %v369
    %v865 = vadd.f32 %v864, %v370
    %v866 = vadd.f32 %v865, %v371
    %v867 = vadd.f32 %v866, %v372
    %v868 = vadd.f32 %v867, %v373
    %v869 = vadd.f32 %v868, %v374
    %v870 = vadd.f32 %v869, %v375
    %v871 = vadd.f32 %v870, %v376
    %v872 = vadd.f32 %v871, %v377
    %v873 = vadd.f32 %v872, %v378
    %v874 = vadd.f32 %v873, %v379
    %875 = vadd.xlane.f32.xlu0 %v874
    %v876 = vpop.xlane.xlu0 %875
    %v877 = vrot.slane %v876, 4
    %v878 = vadd.f32 %v876, %v877
    %v879 = vrot.slane %v878, 2
    %v880 = vadd.f32 %v878, %v879
    %v881 = vrot.slane %v880, 1
    %v882 = vadd.f32 %v880, %v881
    %s883 = vtos %v882
    %v884 = vadd.f32 %v612, %v613
    %v885 = vadd.f32 %v884, %v614
    %v886 = vadd.f32 %v885, %v615
    %v887 = vadd.f32 %v886, %v616
    %v888 = vadd.f32 %v887, %v617
    %v889 = vadd.f32 %v888, %v618
    %v890 = vadd.f32 %v889, %v619
    %v891 = vadd.f32 %v890, %v620
    %v892 = vadd.f32 %v891, %v621
    %v893 = vadd.f32 %v892, %v622
    %v894 = vadd.f32 %v893, %v623
    %v895 = vadd.f32 %v894, %v624
    %v896 = vadd.f32 %v895, %v625
    %v897 = vadd.f32 %v896, %v626
    %v898 = vadd.f32 %v897, %v627
    %v899 = vadd.f32 %v898, %v628
    %v900 = vadd.f32 %v899, %v629
    %v901 = vadd.f32 %v900, %v630
    %v902 = vadd.f32 %v901, %v631
    %v903 = vadd.f32 %v902, %v632
    %v904 = vadd.f32 %v903, %v633
    %v905 = vadd.f32 %v904, %v634
    %v906 = vadd.f32 %v905, %v635
    %v907 = vadd.f32 %v906, %v636
    %v908 = vadd.f32 %v907, %v637
    %v909 = vadd.f32 %v908, %v638
    %v910 = vadd.f32 %v909, %v639
    %v911 = vadd.f32 %v910, %v640
    %v912 = vadd.f32 %v911, %v641
    %v913 = vadd.f32 %v912, %v642
    %v914 = vadd.f32 %v913, %v643
    %v915 = vadd.f32 %v914, %v644
    %v916 = vadd.f32 %v915, %v645
    %v917 = vadd.f32 %v916, %v646
    %v918 = vadd.f32 %v917, %v647
    %v919 = vadd.f32 %v918, %v648
    %v920 = vadd.f32 %v919, %v649
    %v921 = vadd.f32 %v920, %v650
    %v922 = vadd.f32 %v921, %v651
    %v923 = vadd.f32 %v922, %v652
    %v924 = vadd.f32 %v923, %v653
    %v925 = vadd.f32 %v924, %v654
    %v926 = vadd.f32 %v925, %v655
    %v927 = vadd.f32 %v926, %v656
    %v928 = vadd.f32 %v927, %v657
    %v929 = vadd.f32 %v928, %v658
    %v930 = vadd.f32 %v929, %v659
    %v931 = vadd.f32 %v930, %v660
    %v932 = vadd.f32 %v931, %v661
    %v933 = vadd.f32 %v932, %v662
    %v934 = vadd.f32 %v933, %v663
    %v935 = vadd.f32 %v934, %v664
    %v936 = vadd.f32 %v935, %v665
    %v937 = vadd.f32 %v936, %v666
    %v938 = vadd.f32 %v937, %v667
    %v939 = vadd.f32 %v938, %v668
    %v940 = vadd.f32 %v939, %v669
    %v941 = vadd.f32 %v940, %v670
    %v942 = vadd.f32 %v941, %v671
    %v943 = vadd.f32 %v942, %v672
    %v944 = vadd.f32 %v943, %v673
    %v945 = vadd.f32 %v944, %v674
    %v946 = vadd.f32 %v945, %v675
    %947 = vadd.xlane.f32.xlu0 %v946
    %v948 = vpop.xlane.xlu0 %947
    %v949 = vrot.slane %v948, 4
    %v950 = vadd.f32 %v948, %v949
    %v951 = vrot.slane %v950, 2
    %v952 = vadd.f32 %v950, %v951
    %v953 = vrot.slane %v952, 1
    %v954 = vadd.f32 %v952, %v953
    %s955 = vtos %v954
    %s956 = ssub.f32 %s811, 256.0
    %s957 = smul.f32 %s956, 0.5
    %s958 = ssub.f32 %s883, 256.0
    %s959 = smul.f32 %s958, 0.5
    %s960 = ssub.f32 %s955, 256.0
    %s961 = smul.f32 %s960, 0.5
    %s962 = smul.f32 %s959, %s961
    %v963 = vrcp.pop 32640.0
    %s964 = vtos %v963
    %s965 = smul.f32 %s962, %s964
    %s966 = sadd.f32 %s959, %s961
    %s967 = smul.f32 %s966, 0.5
    %s968 = ssub.f32 %s957, %s965
    %s969 = ssub.f32 %s967, %s965
    %s970 = sand.u32 2147483647, %s967
    %s971 = smax.f32 %s970, 1.0
    %s972 = smul.f32 %s971, 1e-06
    %s973 = sand.u32 2147483647, %s969
    %p974 = scmp.le.f32.partialorder %s973, %s972
    %v975 = vstv %s969
    %v976 = vrcp.pop %v975
    %s977 = vtos %v976
    %s978 = smul.f32 %s968, %s977
    %s979 = scalar_select %p974, 1.0, %s978
    %s980 = scalar_lea.smem [#allocation2], 0
    %981 = sst [smem:[%s980]] %s979
    // Predicated region
    $region18: #{tpu_custom_call.1} parent=1 // pred_check
      _
    $region19: #{tpu_custom_call.1} parent=1 // pred_check_branch
      %983 = sbr.rel (0) target = $region21
    $region20: #{tpu_custom_call.1} parent=1 // pred_region
      %s985 = ssub.s32 16, 16
      %986 = vsyncadd [#allocation3], %s985
      %989 = dma.smem_to_hbm [#allocation2], 16, %s4, [#allocation3]
    $region21: #{tpu_custom_call.1} parent=1 // pred_fallthru
      _
    // Predicated region
    $region22: #{tpu_custom_call.1} parent=1 // pred_check
      _
    $region23: #{tpu_custom_call.1} parent=1 // pred_check_branch
      %991 = sbr.rel (0) target = $region25
    $region24: #{tpu_custom_call.1} parent=1 // pred_region
      %992 = dma.done [#allocation3], 16
    $region25: #{tpu_custom_call.1} parent=1 // pred_fallthru
      _
    %993 = sfence
    %994 = vsyncpa [#allocation3], 1

</llo_original>
